<compile_context>
chip_gen: v6e
topology: v6e:2x2x1
jax: 0.10.0
libtpu: 0.0.40
codegen_flags: <defaults>
</compile_context>

<pallas_src>
import functools

import jax
import jax.numpy as jnp
from jax.experimental import pallas as pl
from jax.experimental.pallas import tpu as pltpu


# ----------------------------------------------------------------------------
# Fused Pallas kernel: L graph-filter layers (+ReLU) and the local readout,
# for ONE batch element (batch is the grid axis).
#
# Layout inside the kernel: activations are (F, Np)
#   - features on sublanes, (padded) nodes on the 128-lane axis.
#   - shift   : z @ S      (z is LHS, contracts its lanes)       -> (F, Np)
#   - combine : W_k @ z_k  (z is RHS, contracts its sublanes)    -> (Fout, Np)
# Both are canonical jnp.dot orientations, so no relayouts between taps.
# ----------------------------------------------------------------------------
def _local_gnn_kernel(*refs, taps):
    n_layers = len(taps)
    s_ref = refs[0]                                   # (Np, Np) GSO, compute dtype
    layer_refs = refs[1:1 + 2 * n_layers]             # per layer: W (K,Fout,Fin), b (Fout,1) f32
    wr_ref, br_ref, x_ref = refs[1 + 2 * n_layers:4 + 2 * n_layers]
    y_ref = refs[4 + 2 * n_layers]                    # (R, Np) f32 output block

    s = s_ref[...]                                    # (Np, Np)
    z = x_ref[...]                                    # (F0, Np), compute dtype
    cdt = z.dtype

    # Graph convolutional layers: LSIGF (z_k = z_{k-1} @ S), per-tap combine
    # accumulation (no tap concat), f32 bias + ReLU epilogue.
    for l, K in enumerate(taps):
        w_ref = layer_refs[2 * l]                     # (K, Fout, Fin)
        b_ref = layer_refs[2 * l + 1]                 # (Fout, 1) f32
        zk = z
        acc = jnp.dot(w_ref[0], zk, preferred_element_type=jnp.float32)
        for k in range(1, K):
            zk = jnp.dot(zk, s, preferred_element_type=jnp.float32).astype(cdt)
            acc = acc + jnp.dot(w_ref[k], zk, preferred_element_type=jnp.float32)
        z = jnp.maximum(acc + b_ref[...], 0.0).astype(cdt)   # f32 epilogue, recast

    # Local readout: per-node Linear, no shift, no trailing activation.
    y_ref[...] = (jnp.dot(wr_ref[...], z, preferred_element_type=jnp.float32)
                  + br_ref[...]).astype(y_ref.dtype)


# ----------------------------------------------------------------------------
# Hoisted, one-time operand preparation (no per-forward weight folding).
# ----------------------------------------------------------------------------
def prepare_local_gnn(S, params, taps, compute_dtype=jnp.bfloat16):
    """Pad nodes to a lane-dense multiple of 128, transpose weights to
    (K, Fout, Fin), cast matmul operands to compute_dtype, keep biases f32."""
    N = S.shape[0]
    Np = max(128, ((N + 127) // 128) * 128)
    S_p = jnp.zeros((Np, Np), compute_dtype).at[:N, :N].set(S.astype(compute_dtype))

    layer_ops = []
    dims = []
    for l in range(len(taps)):
        w, b = params["gfl"][l]                       # (K, Fin, Fout), (1, Fout)
        K, Fin, Fout = w.shape
        layer_ops.append(jnp.transpose(w, (0, 2, 1)).astype(compute_dtype))  # (K, Fout, Fin)
        layer_ops.append(b[0][:, None].astype(jnp.float32))                  # (Fout, 1)
        dims.append((K, Fin, Fout))

    w_r, b_r = params["readout"]                      # (F_L, R), (1, R)
    wr = jnp.transpose(w_r).astype(compute_dtype)     # (R, F_L)
    br = b_r[0][:, None].astype(jnp.float32)          # (R, 1)

    return dict(S=S_p, layer_ops=tuple(layer_ops), wr=wr, br=br,
                taps=tuple(taps), dims=tuple(dims), N=N, Np=Np,
                compute_dtype=compute_dtype)


def _resident_spec(shape):
    """Whole-array block, constant index_map -> stays VMEM-resident across the
    batch grid (weights, biases, GSO)."""
    nd = len(shape)
    return pl.BlockSpec(shape, lambda b, _nd=nd: (0,) * _nd)


def local_gnn_forward(x_bfn, prep):
    """x_bfn: (B, F0, N) as in PyTorch.  Returns (B, dimReadout[-1], N), f32."""
    B, F0, N = x_bfn.shape
    Np = prep["Np"]
    cdt = prep["compute_dtype"]
    taps = prep["taps"]
    R = prep["br"].shape[0]
    F_L = prep["wr"].shape[1]

    # Lane-dense, zero-padded input (padded node columns are zero).
    x_p = jnp.zeros((B, F0, Np), cdt).at[:, :, :N].set(x_bfn.astype(cdt))

    operands = (prep["S"],) + prep["layer_ops"] + (prep["wr"], prep["br"], x_p)
    in_specs = [_resident_spec(op.shape) for op in operands[:-1]]
    in_specs.append(pl.BlockSpec((None, F0, Np), lambda b: (b, 0, 0)))
    out_spec = pl.BlockSpec((None, R, Np), lambda b: (b, 0, 0))

    # Advisory cost estimate: shift + tap-combine + readout matmuls.
    flops = 0
    for (K, Fin, Fout) in prep["dims"]:
        flops += B * ((K - 1) * 2 * Fin * Np * Np + K * 2 * Fout * Fin * Np)
    flops += B * 2 * R * F_L * Np
    bytes_accessed = sum(int(op.size) * int(op.dtype.itemsize) for op in operands)
    bytes_accessed += B * R * Np * 4

    kernel = functools.partial(_local_gnn_kernel, taps=taps)
    out = pl.pallas_call(
        kernel,
        grid=(B,),
        in_specs=in_specs,
        out_specs=out_spec,
        out_shape=jax.ShapeDtypeStruct((B, R, Np), jnp.float32),
        compiler_params=pltpu.CompilerParams(
            dimension_semantics=("parallel",),          # v7x: split batch over 2 TCs
            vmem_limit_bytes=32 * 1024 * 1024),          # covers v5e's 16 MiB default
        cost_estimate=pl.CostEstimate(flops=flops, transcendentals=0,
                                      bytes_accessed=bytes_accessed),
    )(*operands)

    return out[:, :, :N] if Np != N else out


# ----------------------------------------------------------------------------
# Pure-JAX f32 reference mirroring the PyTorch code (for verification)
# ----------------------------------------------------------------------------
def reference_forward(x_bfn, S, params, taps):
    x = x_bfn                                                    # (B, F, N)
    for l, K in enumerate(taps):
        w, b = params["gfl"][l]                                  # (K, Fin, Fout), (1, Fout)
        z = x
        y = jnp.einsum("bfn,fg->bgn", z, w[0])
        for k in range(1, K):
            z = jnp.matmul(z, S)                                 # z_k = z_{k-1} @ S (LSIGF)
            y = y + jnp.einsum("bfn,fg->bgn", z, w[k])
        y = y + b.T[None, :, :]
        x = jnp.maximum(y, 0.0)
    w_r, b_r = params["readout"]
    return jnp.einsum("bfn,fr->brn", x, w_r) + b_r.T[None, :, :]


# ----------------------------------------------------------------------------
if __name__ == "__main__":
    key = jax.random.PRNGKey(0)

    # Small shapes consistent with the module's forward:
    B, N = 2, 16
    dimNodeSignals = [4, 32, 32]      # F0, F1, F2
    nFilterTaps = [3, 2]              # K per layer
    dimReadout = [8]

    # Deterministic symmetric GSO, normalized.
    key, k_s = jax.random.split(key)
    A = jax.random.uniform(k_s, (N, N), dtype=jnp.float32)
    A = (A + A.T) * 0.5
    A = A - jnp.diag(jnp.diag(A))
    S = A / jnp.max(jnp.abs(jnp.linalg.eigvalsh(A)))

    # Deterministic parameters (per-tap weights stored as (K, Fin, Fout)).
    params = {"gfl": [], "readout": None}
    for l, K in enumerate(nFilterTaps):
        Fin, Fout = dimNodeSignals[l], dimNodeSignals[l + 1]
        key, kw, kb = jax.random.split(key, 3)
        w = jax.random.normal(kw, (K, Fin, Fout), dtype=jnp.float32) / jnp.sqrt(K * Fin)
        b = jax.random.normal(kb, (1, Fout), dtype=jnp.float32) * 0.1
        params["gfl"].append((w, b))
    key, kw, kb = jax.random.split(key, 3)
    w_r = jax.random.normal(kw, (dimNodeSignals[-1], dimReadout[0]),
                            dtype=jnp.float32) / jnp.sqrt(dimNodeSignals[-1])
    b_r = jax.random.normal(kb, (1, dimReadout[0]), dtype=jnp.float32) * 0.1
    params["readout"] = (w_r, b_r)

    # Input: batchSize x dimFeatures x numberNodes
    key, kx = jax.random.split(key)
    x = jax.random.normal(kx, (B, dimNodeSignals[0], N), dtype=jnp.float32)

    ref = reference_forward(x, S, params, nFilterTaps)

    # f32 compute path: exact-semantics parity with the PyTorch-style reference.
    prep_f32 = prepare_local_gnn(S, params, nFilterTaps, compute_dtype=jnp.float32)
    out_f32 = jax.block_until_ready(local_gnn_forward(x, prep_f32))
    assert out_f32.shape == (B, dimReadout[-1], N), out_f32.shape
    err32 = float(jnp.max(jnp.abs(out_f32 - ref)))
    assert jnp.allclose(out_f32, ref, atol=1e-4, rtol=1e-4), err32

    # bf16-operand / f32-accumulate path (the performance configuration).
    prep_bf16 = prepare_local_gnn(S, params, nFilterTaps, compute_dtype=jnp.bfloat16)
    out_bf16 = jax.block_until_ready(local_gnn_forward(x, prep_bf16))
    assert out_bf16.shape == (B, dimReadout[-1], N), out_bf16.shape
    errbf = float(jnp.max(jnp.abs(out_bf16 - ref)))
    assert jnp.allclose(out_bf16, ref, atol=1e-1, rtol=5e-2), errbf

    print("KERNEL_OK")
</pallas_src>

<mosaic_0001>
module attributes {stable_mosaic.version = 11 : i64} {
  func.func @_local_gnn_kernel(%arg0: i32, %arg1: memref<128x128xf32, #tpu.memory_space<vmem>>, %arg2: memref<3x32x4xf32, #tpu.memory_space<vmem>>, %arg3: memref<32x1xf32, #tpu.memory_space<vmem>>, %arg4: memref<2x32x32xf32, #tpu.memory_space<vmem>>, %arg5: memref<32x1xf32, #tpu.memory_space<vmem>>, %arg6: memref<8x32xf32, #tpu.memory_space<vmem>>, %arg7: memref<8x1xf32, #tpu.memory_space<vmem>>, %arg8: memref<1x4x128xf32, #tpu.memory_space<vmem>>, %arg9: memref<1x8x128xf32, #tpu.memory_space<vmem>>) attributes {dimension_semantics = [#tpu.dimension_semantics<parallel>], iteration_bounds = array<i64: 2>, scalar_prefetch = 0 : i64, scratch_operands = 0 : i64, tpu.core_type = #tpu.core_type<tc>, window_params = [{pipeline_mode = #tpu.pipeline_mode<synchronous>, transform_indices = @transform_0, window_bounds = array<i64: 128, 128>}, {pipeline_mode = #tpu.pipeline_mode<synchronous>, transform_indices = @transform_1, window_bounds = array<i64: 3, 32, 4>}, {pipeline_mode = #tpu.pipeline_mode<synchronous>, transform_indices = @transform_2, window_bounds = array<i64: 32, 1>}, {pipeline_mode = #tpu.pipeline_mode<synchronous>, transform_indices = @transform_3, window_bounds = array<i64: 2, 32, 32>}, {pipeline_mode = #tpu.pipeline_mode<synchronous>, transform_indices = @transform_4, window_bounds = array<i64: 32, 1>}, {pipeline_mode = #tpu.pipeline_mode<synchronous>, transform_indices = @transform_5, window_bounds = array<i64: 8, 32>}, {pipeline_mode = #tpu.pipeline_mode<synchronous>, transform_indices = @transform_6, window_bounds = array<i64: 8, 1>}, {transform_indices = @transform_7, window_bounds = array<i64: 1, 4, 128>}, {transform_indices = @transform_8, window_bounds = array<i64: 1, 8, 128>}]} {
    %c0 = arith.constant 0 : index
    %c0_0 = arith.constant 0 : index
    %0 = vector.load %arg1[%c0, %c0_0] : memref<128x128xf32, #tpu.memory_space<vmem>>, vector<128x128xf32>
    %c0_1 = arith.constant 0 : index
    %c0_2 = arith.constant 0 : index
    %c0_3 = arith.constant 0 : index
    %1 = vector.load %arg8[%c0_1, %c0_2, %c0_3] : memref<1x4x128xf32, #tpu.memory_space<vmem>>, vector<1x4x128xf32>
    %2 = vector.shape_cast %1 : vector<1x4x128xf32> to vector<4x128xf32>
    %c0_4 = arith.constant 0 : index
    %c0_5 = arith.constant 0 : index
    %c0_6 = arith.constant 0 : index
    %3 = vector.load %arg2[%c0_4, %c0_5, %c0_6] : memref<3x32x4xf32, #tpu.memory_space<vmem>>, vector<1x32x4xf32>
    %4 = vector.shape_cast %3 : vector<1x32x4xf32> to vector<32x4xf32>
    %cst = arith.constant dense<0.000000e+00> : vector<32x128xf32>
    %5 = tpu.matmul %4, %2, %cst {dimension_numbers = #tpu.dot_dimension_numbers<[1], [0], [0], [1], [0, 0, 1, 1], [], []>} : vector<32x4xf32>, vector<4x128xf32>, vector<32x128xf32> -> vector<32x128xf32>
    %cst_7 = arith.constant dense<0.000000e+00> : vector<4x128xf32>
    %6 = tpu.matmul %2, %0, %cst_7 {dimension_numbers = #tpu.dot_dimension_numbers<[1], [0], [0], [1], [0, 0, 1, 1], [], []>} : vector<4x128xf32>, vector<128x128xf32>, vector<4x128xf32> -> vector<4x128xf32>
    %c1 = arith.constant 1 : index
    %c0_8 = arith.constant 0 : index
    %c0_9 = arith.constant 0 : index
    %7 = vector.load %arg2[%c1, %c0_8, %c0_9] : memref<3x32x4xf32, #tpu.memory_space<vmem>>, vector<1x32x4xf32>
    %8 = vector.shape_cast %7 : vector<1x32x4xf32> to vector<32x4xf32>
    %cst_10 = arith.constant dense<0.000000e+00> : vector<32x128xf32>
    %9 = tpu.matmul %8, %6, %cst_10 {dimension_numbers = #tpu.dot_dimension_numbers<[1], [0], [0], [1], [0, 0, 1, 1], [], []>} : vector<32x4xf32>, vector<4x128xf32>, vector<32x128xf32> -> vector<32x128xf32>
    %10 = arith.addf %5, %9 : vector<32x128xf32>
    %cst_11 = arith.constant dense<0.000000e+00> : vector<4x128xf32>
    %11 = tpu.matmul %6, %0, %cst_11 {dimension_numbers = #tpu.dot_dimension_numbers<[1], [0], [0], [1], [0, 0, 1, 1], [], []>} : vector<4x128xf32>, vector<128x128xf32>, vector<4x128xf32> -> vector<4x128xf32>
    %c2 = arith.constant 2 : index
    %c0_12 = arith.constant 0 : index
    %c0_13 = arith.constant 0 : index
    %12 = vector.load %arg2[%c2, %c0_12, %c0_13] : memref<3x32x4xf32, #tpu.memory_space<vmem>>, vector<1x32x4xf32>
    %13 = vector.shape_cast %12 : vector<1x32x4xf32> to vector<32x4xf32>
    %cst_14 = arith.constant dense<0.000000e+00> : vector<32x128xf32>
    %14 = tpu.matmul %13, %11, %cst_14 {dimension_numbers = #tpu.dot_dimension_numbers<[1], [0], [0], [1], [0, 0, 1, 1], [], []>} : vector<32x4xf32>, vector<4x128xf32>, vector<32x128xf32> -> vector<32x128xf32>
    %15 = arith.addf %10, %14 : vector<32x128xf32>
    %c0_15 = arith.constant 0 : index
    %c0_16 = arith.constant 0 : index
    %16 = vector.load %arg3[%c0_15, %c0_16] : memref<32x1xf32, #tpu.memory_space<vmem>>, vector<32x1xf32>
    %17 = vector.broadcast %16 : vector<32x1xf32> to vector<32x128xf32>
    %18 = arith.addf %15, %17 : vector<32x128xf32>
    %cst_17 = arith.constant 0.000000e+00 : f32
    %19 = vector.broadcast %cst_17 : f32 to vector<32x128xf32>
    %20 = arith.maximumf %18, %19 : vector<32x128xf32>
    %c0_18 = arith.constant 0 : index
    %c0_19 = arith.constant 0 : index
    %c0_20 = arith.constant 0 : index
    %21 = vector.load %arg4[%c0_18, %c0_19, %c0_20] : memref<2x32x32xf32, #tpu.memory_space<vmem>>, vector<1x32x32xf32>
    %22 = vector.shape_cast %21 : vector<1x32x32xf32> to vector<32x32xf32>
    %cst_21 = arith.constant dense<0.000000e+00> : vector<32x128xf32>
    %23 = tpu.matmul %22, %20, %cst_21 {dimension_numbers = #tpu.dot_dimension_numbers<[1], [0], [0], [1], [0, 0, 1, 1], [], []>} : vector<32x32xf32>, vector<32x128xf32>, vector<32x128xf32> -> vector<32x128xf32>
    %cst_22 = arith.constant dense<0.000000e+00> : vector<32x128xf32>
    %24 = tpu.matmul %20, %0, %cst_22 {dimension_numbers = #tpu.dot_dimension_numbers<[1], [0], [0], [1], [0, 0, 1, 1], [], []>} : vector<32x128xf32>, vector<128x128xf32>, vector<32x128xf32> -> vector<32x128xf32>
    %c1_23 = arith.constant 1 : index
    %c0_24 = arith.constant 0 : index
    %c0_25 = arith.constant 0 : index
    %25 = vector.load %arg4[%c1_23, %c0_24, %c0_25] : memref<2x32x32xf32, #tpu.memory_space<vmem>>, vector<1x32x32xf32>
    %26 = vector.shape_cast %25 : vector<1x32x32xf32> to vector<32x32xf32>
    %cst_26 = arith.constant dense<0.000000e+00> : vector<32x128xf32>
    %27 = tpu.matmul %26, %24, %cst_26 {dimension_numbers = #tpu.dot_dimension_numbers<[1], [0], [0], [1], [0, 0, 1, 1], [], []>} : vector<32x32xf32>, vector<32x128xf32>, vector<32x128xf32> -> vector<32x128xf32>
    %28 = arith.addf %23, %27 : vector<32x128xf32>
    %c0_27 = arith.constant 0 : index
    %c0_28 = arith.constant 0 : index
    %29 = vector.load %arg5[%c0_27, %c0_28] : memref<32x1xf32, #tpu.memory_space<vmem>>, vector<32x1xf32>
    %30 = vector.broadcast %29 : vector<32x1xf32> to vector<32x128xf32>
    %31 = arith.addf %28, %30 : vector<32x128xf32>
    %cst_29 = arith.constant 0.000000e+00 : f32
    %32 = vector.broadcast %cst_29 : f32 to vector<32x128xf32>
    %33 = arith.maximumf %31, %32 : vector<32x128xf32>
    %c0_30 = arith.constant 0 : index
    %c0_31 = arith.constant 0 : index
    %34 = vector.load %arg6[%c0_30, %c0_31] : memref<8x32xf32, #tpu.memory_space<vmem>>, vector<8x32xf32>
    %cst_32 = arith.constant dense<0.000000e+00> : vector<8x128xf32>
    %35 = tpu.matmul %34, %33, %cst_32 {dimension_numbers = #tpu.dot_dimension_numbers<[1], [0], [0], [1], [0, 0, 1, 1], [], []>} : vector<8x32xf32>, vector<32x128xf32>, vector<8x128xf32> -> vector<8x128xf32>
    %c0_33 = arith.constant 0 : index
    %c0_34 = arith.constant 0 : index
    %36 = vector.load %arg7[%c0_33, %c0_34] : memref<8x1xf32, #tpu.memory_space<vmem>>, vector<8x1xf32>
    %37 = vector.broadcast %36 : vector<8x1xf32> to vector<8x128xf32>
    %38 = arith.addf %35, %37 : vector<8x128xf32>
    %c0_35 = arith.constant 0 : index
    %c0_36 = arith.constant 0 : index
    %c0_37 = arith.constant 0 : index
    %39 = vector.load %arg9[%c0_35, %c0_36, %c0_37] : memref<1x8x128xf32, #tpu.memory_space<vmem>>, vector<1x8x128xf32>
    %40 = vector.shape_cast %39 : vector<1x8x128xf32> to vector<8x128xf32>
    %41 = vector.shape_cast %38 : vector<8x128xf32> to vector<1x8x128xf32>
    tpu.vector_store %arg9[%c0_35, %c0_36, %c0_37], %41 {strides = array<i32>} : memref<1x8x128xf32, #tpu.memory_space<vmem>>, vector<1x8x128xf32>,
    return
  }
  func.func @transform_0(%arg0: i32) -> (i32, i32) {
    %c0_i32 = arith.constant 0 : i32
    %c0_i32_0 = arith.constant 0 : i32
    %c0_i32_1 = arith.constant 0 : i32
    return %c0_i32, %c0_i32_0 : i32, i32
  }
  func.func @transform_1(%arg0: i32) -> (i32, i32, i32) {
    %c0_i32 = arith.constant 0 : i32
    %c0_i32_0 = arith.constant 0 : i32
    %c0_i32_1 = arith.constant 0 : i32
    %c0_i32_2 = arith.constant 0 : i32
    return %c0_i32, %c0_i32_0, %c0_i32_1 : i32, i32, i32
  }
  func.func @transform_2(%arg0: i32) -> (i32, i32) {
    %c0_i32 = arith.constant 0 : i32
    %c0_i32_0 = arith.constant 0 : i32
    %c0_i32_1 = arith.constant 0 : i32
    return %c0_i32, %c0_i32_0 : i32, i32
  }
  func.func @transform_3(%arg0: i32) -> (i32, i32, i32) {
    %c0_i32 = arith.constant 0 : i32
    %c0_i32_0 = arith.constant 0 : i32
    %c0_i32_1 = arith.constant 0 : i32
    %c0_i32_2 = arith.constant 0 : i32
    return %c0_i32, %c0_i32_0, %c0_i32_1 : i32, i32, i32
  }
  func.func @transform_4(%arg0: i32) -> (i32, i32) {
    %c0_i32 = arith.constant 0 : i32
    %c0_i32_0 = arith.constant 0 : i32
    %c0_i32_1 = arith.constant 0 : i32
    return %c0_i32, %c0_i32_0 : i32, i32
  }
  func.func @transform_5(%arg0: i32) -> (i32, i32) {
    %c0_i32 = arith.constant 0 : i32
    %c0_i32_0 = arith.constant 0 : i32
    %c0_i32_1 = arith.constant 0 : i32
    return %c0_i32, %c0_i32_0 : i32, i32
  }
  func.func @transform_6(%arg0: i32) -> (i32, i32) {
    %c0_i32 = arith.constant 0 : i32
    %c0_i32_0 = arith.constant 0 : i32
    %c0_i32_1 = arith.constant 0 : i32
    return %c0_i32, %c0_i32_0 : i32, i32
  }
  func.func @transform_7(%arg0: i32) -> (i32, i32, i32) {
    %c0_i32 = arith.constant 0 : i32
    %c0_i32_0 = arith.constant 0 : i32
    %c0_i32_1 = arith.constant 0 : i32
    return %arg0, %c0_i32, %c0_i32_0 : i32, i32, i32
  }
  func.func @transform_8(%arg0: i32) -> (i32, i32, i32) {
    %c0_i32 = arith.constant 0 : i32
    %c0_i32_0 = arith.constant 0 : i32
    %c0_i32_1 = arith.constant 0 : i32
    return %arg0, %c0_i32, %c0_i32_0 : i32, i32, i32
  }
}

</mosaic_0001>

<llo_original>
// kernel: tpu_custom_call.1
$region0: #{tpu_custom_call.1}
  #allocation0 [shape = 'u32[]', space=smem, size = 0x4, offset = 0x4, fixed_abs, tag = 'smem constant byte address 0x4 - core index']
  #allocation1 [shape = 'u32[144,128]{1,0:T(1,128)}', space=vmem, size = 0x12000, scoped, tag = 'internal scratch']
  %s0 = inlined_call_operand.vmem [shape: f32[128,128], index: 0, kind: input, shape index: {}]
  %s1 = inlined_call_operand.vmem [shape: f32[3,32,4], index: 1, kind: input, shape index: {}]
  %s2 = inlined_call_operand.vmem [shape: f32[32,1], index: 2, kind: input, shape index: {}]
  %s3 = inlined_call_operand.hbm [shape: f32[2,32,32], index: 3, kind: input, shape index: {}]
  %s4 = inlined_call_operand.vmem [shape: f32[32,1], index: 4, kind: input, shape index: {}]
  %s5 = inlined_call_operand.vmem [shape: f32[8,32], index: 5, kind: input, shape index: {}]
  %s6 = inlined_call_operand.vmem [shape: f32[8,1], index: 6, kind: input, shape index: {}]
  %s7 = inlined_call_operand.vmem [shape: f32[2,4,128], index: 7, kind: input, shape index: {}]
  %s8 = inlined_call_operand.hbm [shape: f32[2,8,128], index: 8, kind: output, shape index: {}]
  %s9 = sld [smem:[#allocation0]]
  $region69: #{tpu_custom_call.1} parent=0
    _
  %s11 = ssub.s32 1, %s9
  %s12 = scalar_select 0, %s11, %s9
  $region1: #{tpu_custom_call.1} parent=0
    #allocation2 [shape = 'u8[32768]{0}', space=vmem, size = 0x8000, scoped, tag = 'input window, operand 3, single buffered']
    #allocation3 [shape = 's32[2]{0}', space=sflag, size = 0x8, scoped, tag = 'scoped memory for tpu_custom_call.1']
    #allocation4 [shape = 's32[2]{0}', space=sflag, size = 0x8, scoped, tag = 'scoped memory for tpu_custom_call.1']
    #allocation5 [shape = 'u8[8192]{0}', space=vmem, size = 0x2000, scoped, tag = 'output window, operand 0']
    %13 = vsyncpa [#allocation3], 0
    %14 = vsyncpa [#allocation4], 0
    %s15 = scalar_lea.sflag [#allocation4], 1
    %16 = vsyncpa %s15, 0
    loop: start=0, step=1, limit=4
    $region2: #{tpu_custom_call.1} parent=1 // loop_pre_header
      _
    $region3: #{tpu_custom_call.1} parent=1 // loop_header
      %s18 = sphi 0, %s22
      %p19 = scmp.ge.s32.totalorder %s18, 4
      %s26 = sphi 0, %s26
      %s28 = sphi 0, %s26
      %s29 = sphi 0, %s28
      %s43 = sphi 0, %s29
      %s47 = sphi 0, %s47
      %s49 = sphi 0, %s47
      %s50 = sphi 0, %s49
      %s64 = sphi 0, %s50
      %s68 = sphi 0, %s68
      %s70 = sphi 0, %s68
      %s71 = sphi 0, %s70
      %s85 = sphi 0, %s71
      %s89 = sphi 0, %s89
      %s91 = sphi 0, %s89
      %s92 = sphi 0, %s91
      %s106 = sphi 0, %s92
      %s110 = sphi 0, %s110
      %s112 = sphi 0, %s110
      %s113 = sphi 0, %s112
      %s127 = sphi 0, %s113
      %s131 = sphi 0, %s131
      %s133 = sphi 0, %s131
      %s134 = sphi 0, %s133
      %s148 = sphi 0, %s134
      %s152 = sphi 0, %s152
      %s154 = sphi 0, %s152
      %s155 = sphi 0, %s154
      %s169 = sphi 0, %s155
      %s175 = sphi 0, %s177
      %s178 = sphi 0, %s175
      %s179 = sphi 0, %s178
      %s195 = sphi 0, %s179
      %s201 = sphi 0, %s203
      %s204 = sphi 0, %s201
      %s205 = sphi 0, %s204
      %s221 = sphi 0, %s205
    $region4: #{tpu_custom_call.1} parent=1 // loop_header_branch
      %21 = sbr.rel (%p19) target = $region8
    $region5: #{tpu_custom_call.1} parent=1 // loop_body
      %s23 = ssub.s32 %s18, 1
      %s24 = ssub.s32 %s18, 2
      %s25 = sadd.s32 %s18, 1
      %s27 = sadd.s32 %s26, 1
      %p30 = scmp.eq.s32.totalorder %s18, 1
      %p31 = scmp.ne.s32.totalorder %s26, %s28
      %p32 = scmp.eq.s32.totalorder %s18, 0
      %p33 = por %p31, %p32
      %p34 = scmp.ne.s32.totalorder %s26, %s28
      %p35 = scmp.eq.s32.totalorder %s23, 1
      %p36 = por %p34, %p35
      %p37 = scmp.ne.s32.totalorder %s28, %s29
      %p38 = scmp.eq.s32.totalorder %s23, 0
      %p39 = por %p37, %p38
      %p40 = scmp.ne.s32.totalorder %s28, %s29
      %p41 = scmp.eq.s32.totalorder %s24, 1
      %p42 = por %p40, %p41
      %p44 = scmp.ne.s32.totalorder %s29, %s43
      %p45 = scmp.eq.s32.totalorder %s24, 0
      %p46 = por %p44, %p45
      %s48 = sadd.s32 %s47, 1
      %p51 = scmp.eq.s32.totalorder %s18, 1
      %p52 = scmp.ne.s32.totalorder %s47, %s49
      %p53 = scmp.eq.s32.totalorder %s18, 0
      %p54 = por %p52, %p53
      %p55 = scmp.ne.s32.totalorder %s47, %s49
      %p56 = scmp.eq.s32.totalorder %s23, 1
      %p57 = por %p55, %p56
      %p58 = scmp.ne.s32.totalorder %s49, %s50
      %p59 = scmp.eq.s32.totalorder %s23, 0
      %p60 = por %p58, %p59
      %p61 = scmp.ne.s32.totalorder %s49, %s50
      %p62 = scmp.eq.s32.totalorder %s24, 1
      %p63 = por %p61, %p62
      %p65 = scmp.ne.s32.totalorder %s50, %s64
      %p66 = scmp.eq.s32.totalorder %s24, 0
      %p67 = por %p65, %p66
      %s69 = sadd.s32 %s68, 1
      %p72 = scmp.eq.s32.totalorder %s18, 1
      %p73 = scmp.ne.s32.totalorder %s68, %s70
      %p74 = scmp.eq.s32.totalorder %s18, 0
      %p75 = por %p73, %p74
      %p76 = scmp.ne.s32.totalorder %s68, %s70
      %p77 = scmp.eq.s32.totalorder %s23, 1
      %p78 = por %p76, %p77
      %p79 = scmp.ne.s32.totalorder %s70, %s71
      %p80 = scmp.eq.s32.totalorder %s23, 0
      %p81 = por %p79, %p80
      %p82 = scmp.ne.s32.totalorder %s70, %s71
      %p83 = scmp.eq.s32.totalorder %s24, 1
      %p84 = por %p82, %p83
      %p86 = scmp.ne.s32.totalorder %s71, %s85
      %p87 = scmp.eq.s32.totalorder %s24, 0
      %p88 = por %p86, %p87
      %s90 = sadd.s32 %s89, 1
      %p93 = scmp.eq.s32.totalorder %s18, 1
      %p94 = scmp.ne.s32.totalorder %s89, %s91
      %p95 = scmp.eq.s32.totalorder %s18, 0
      %p96 = por %p94, %p95
      %p97 = scmp.ne.s32.totalorder %s89, %s91
      %p98 = scmp.eq.s32.totalorder %s23, 1
      %p99 = por %p97, %p98
      %p100 = scmp.ne.s32.totalorder %s91, %s92
      %p101 = scmp.eq.s32.totalorder %s23, 0
      %p102 = por %p100, %p101
      %p103 = scmp.ne.s32.totalorder %s91, %s92
      %p104 = scmp.eq.s32.totalorder %s24, 1
      %p105 = por %p103, %p104
      %p107 = scmp.ne.s32.totalorder %s92, %s106
      %p108 = scmp.eq.s32.totalorder %s24, 0
      %p109 = por %p107, %p108
      %s111 = sadd.s32 %s110, 1
      %p114 = scmp.eq.s32.totalorder %s18, 1
      %p115 = scmp.ne.s32.totalorder %s110, %s112
      %p116 = scmp.eq.s32.totalorder %s18, 0
      %p117 = por %p115, %p116
      %p118 = scmp.ne.s32.totalorder %s110, %s112
      %p119 = scmp.eq.s32.totalorder %s23, 1
      %p120 = por %p118, %p119
      %p121 = scmp.ne.s32.totalorder %s112, %s113
      %p122 = scmp.eq.s32.totalorder %s23, 0
      %p123 = por %p121, %p122
      %p124 = scmp.ne.s32.totalorder %s112, %s113
      %p125 = scmp.eq.s32.totalorder %s24, 1
      %p126 = por %p124, %p125
      %p128 = scmp.ne.s32.totalorder %s113, %s127
      %p129 = scmp.eq.s32.totalorder %s24, 0
      %p130 = por %p128, %p129
      %s132 = sadd.s32 %s131, 1
      %p135 = scmp.eq.s32.totalorder %s18, 1
      %p136 = scmp.ne.s32.totalorder %s131, %s133
      %p137 = scmp.eq.s32.totalorder %s18, 0
      %p138 = por %p136, %p137
      %p139 = scmp.ne.s32.totalorder %s131, %s133
      %p140 = scmp.eq.s32.totalorder %s23, 1
      %p141 = por %p139, %p140
      %p142 = scmp.ne.s32.totalorder %s133, %s134
      %p143 = scmp.eq.s32.totalorder %s23, 0
      %p144 = por %p142, %p143
      %p145 = scmp.ne.s32.totalorder %s133, %s134
      %p146 = scmp.eq.s32.totalorder %s24, 1
      %p147 = por %p145, %p146
      %p149 = scmp.ne.s32.totalorder %s134, %s148
      %p150 = scmp.eq.s32.totalorder %s24, 0
      %p151 = por %p149, %p150
      %s153 = sadd.s32 %s152, 1
      %p156 = scmp.eq.s32.totalorder %s18, 1
      %p157 = scmp.ne.s32.totalorder %s152, %s154
      %p158 = scmp.eq.s32.totalorder %s18, 0
      %p159 = por %p157, %p158
      %p160 = scmp.ne.s32.totalorder %s152, %s154
      %p161 = scmp.eq.s32.totalorder %s23, 1
      %p162 = por %p160, %p161
      %p163 = scmp.ne.s32.totalorder %s154, %s155
      %p164 = scmp.eq.s32.totalorder %s23, 0
      %p165 = por %p163, %p164
      %p166 = scmp.ne.s32.totalorder %s154, %s155
      %p167 = scmp.eq.s32.totalorder %s24, 1
      %p168 = por %p166, %p167
      %p170 = scmp.ne.s32.totalorder %s155, %s169
      %p171 = scmp.eq.s32.totalorder %s24, 0
      %p172 = por %p170, %p171
      %s173 = ssub.s32 %s18, %s25
      %p174 = scmp.eq.s32.totalorder %s173, 0
      %s176 = sadd.s32 %s175, 1
      %s177 = scalar_select %p174, %s175, %s176
      %p180 = pneg %p174
      %p181 = scmp.eq.s32.totalorder %s18, 1
      %p182 = por %p180, %p181
      %p183 = scmp.ne.s32.totalorder %s175, %s178
      %p184 = scmp.eq.s32.totalorder %s18, 0
      %p185 = por %p183, %p184
      %p186 = scmp.ne.s32.totalorder %s175, %s178
      %p187 = scmp.eq.s32.totalorder %s23, 1
      %p188 = por %p186, %p187
      %p189 = scmp.ne.s32.totalorder %s178, %s179
      %p190 = scmp.eq.s32.totalorder %s23, 0
      %p191 = por %p189, %p190
      %p192 = scmp.ne.s32.totalorder %s178, %s179
      %p193 = scmp.eq.s32.totalorder %s24, 1
      %p194 = por %p192, %p193
      %p196 = scmp.ne.s32.totalorder %s179, %s195
      %p197 = scmp.eq.s32.totalorder %s24, 0
      %p198 = por %p196, %p197
      %s199 = ssub.s32 %s18, %s25
      %p200 = scmp.eq.s32.totalorder %s199, 0
      %s202 = sadd.s32 %s201, 1
      %s203 = scalar_select %p200, %s201, %s202
      %p206 = pneg %p200
      %p207 = scmp.eq.s32.totalorder %s18, 1
      %p208 = por %p206, %p207
      %p209 = scmp.ne.s32.totalorder %s201, %s204
      %p210 = scmp.eq.s32.totalorder %s18, 0
      %p211 = por %p209, %p210
      %p212 = scmp.ne.s32.totalorder %s201, %s204
      %p213 = scmp.eq.s32.totalorder %s23, 1
      %p214 = por %p212, %p213
      %p215 = scmp.ne.s32.totalorder %s204, %s205
      %p216 = scmp.eq.s32.totalorder %s23, 0
      %p217 = por %p215, %p216
      %p218 = scmp.ne.s32.totalorder %s204, %s205
      %p219 = scmp.eq.s32.totalorder %s24, 1
      %p220 = por %p218, %p219
      %p222 = scmp.ne.s32.totalorder %s205, %s221
      %p223 = scmp.eq.s32.totalorder %s24, 0
      %p224 = por %p222, %p223
      %p225 = scmp.le.s32.totalorder 1, %s18
      %p226 = scmp.lt.s32.totalorder %s18, 3
      %p227 = pnand %p225, %p226
      %p228 = pneg %p227
      // Predicated region
      $region9: #{tpu_custom_call.1} parent=5 // pred_check
        _
      $region10: #{tpu_custom_call.1} parent=5 // pred_check_branch
        %230 = sbr.rel (%p227) target = $region12
      $region11: #{tpu_custom_call.1} parent=5 // pred_region
        %s231 = ssub.s32 %s18, 1
        // Predicated region
        $region13: #{tpu_custom_call.1} parent=11 // pred_check
          %p232 = pneg %p39
        $region14: #{tpu_custom_call.1} parent=11 // pred_check_branch
          %234 = sbr.rel (%p232) target = $region16
        $region15: #{tpu_custom_call.1} parent=11 // pred_region
          _
        $region16: #{tpu_custom_call.1} parent=11 // pred_fallthru
          _
        // Predicated region
        $region17: #{tpu_custom_call.1} parent=11 // pred_check
          %p235 = pneg %p60
        $region18: #{tpu_custom_call.1} parent=11 // pred_check_branch
          %237 = sbr.rel (%p235) target = $region20
        $region19: #{tpu_custom_call.1} parent=11 // pred_region
          _
        $region20: #{tpu_custom_call.1} parent=11 // pred_fallthru
          _
        // Predicated region
        $region21: #{tpu_custom_call.1} parent=11 // pred_check
          %p238 = pneg %p81
        $region22: #{tpu_custom_call.1} parent=11 // pred_check_branch
          %240 = sbr.rel (%p238) target = $region24
        $region23: #{tpu_custom_call.1} parent=11 // pred_region
          _
        $region24: #{tpu_custom_call.1} parent=11 // pred_fallthru
          _
        // Predicated region
        $region25: #{tpu_custom_call.1} parent=11 // pred_check
          %p241 = pneg %p102
        $region26: #{tpu_custom_call.1} parent=11 // pred_check_branch
          %243 = sbr.rel (%p241) target = $region28
        $region27: #{tpu_custom_call.1} parent=11 // pred_region
          %s245 = ssub.s32 1024, 1024
          %246 = vsyncadd [#allocation3], %s245
          %s247 = sshll.u32 [#allocation2], 4
          %s248 = int_to_ptr.vmem [resolvable:$true] %s247
          %253 = dma.hbm_to_vmem [thread:$0]  %s3, 1024, %s248, [#allocation3], 128, 128, 8
        $region28: #{tpu_custom_call.1} parent=11 // pred_fallthru
          _
        // Predicated region
        $region29: #{tpu_custom_call.1} parent=11 // pred_check
          %p254 = pneg %p123
        $region30: #{tpu_custom_call.1} parent=11 // pred_check_branch
          %256 = sbr.rel (%p254) target = $region32
        $region31: #{tpu_custom_call.1} parent=11 // pred_region
          _
        $region32: #{tpu_custom_call.1} parent=11 // pred_fallthru
          _
        // Predicated region
        $region33: #{tpu_custom_call.1} parent=11 // pred_check
          %p257 = pneg %p144
        $region34: #{tpu_custom_call.1} parent=11 // pred_check_branch
          %259 = sbr.rel (%p257) target = $region36
        $region35: #{tpu_custom_call.1} parent=11 // pred_region
          _
        $region36: #{tpu_custom_call.1} parent=11 // pred_fallthru
          _
        // Predicated region
        $region37: #{tpu_custom_call.1} parent=11 // pred_check
          %p260 = pneg %p165
        $region38: #{tpu_custom_call.1} parent=11 // pred_check_branch
          %262 = sbr.rel (%p260) target = $region40
        $region39: #{tpu_custom_call.1} parent=11 // pred_region
          _
        $region40: #{tpu_custom_call.1} parent=11 // pred_fallthru
          _
      $region12: #{tpu_custom_call.1} parent=5 // pred_fallthru
        _
      %p263 = scmp.lt.s32.totalorder %s18, 2
      // Predicated region
      $region41: #{tpu_custom_call.1} parent=5 // pred_check
        %p264 = pneg %p263
      $region42: #{tpu_custom_call.1} parent=5 // pred_check_branch
        %266 = sbr.rel (%p264) target = $region44
      $region43: #{tpu_custom_call.1} parent=5 // pred_region
        // Predicated region
        $region45: #{tpu_custom_call.1} parent=43 // pred_check
          %p267 = pneg %p185
        $region46: #{tpu_custom_call.1} parent=43 // pred_check_branch
          %269 = sbr.rel (%p267) target = $region48
        $region47: #{tpu_custom_call.1} parent=43 // pred_region
          %p270 = scmp.lt.s32.totalorder %s18, 1
          %s271 = scalar_select %p270, %s18, 1
          %s272 = smul.addr %s271, 4
          %s273 = scalar_lea.vmem %s7, %s272
        $region48: #{tpu_custom_call.1} parent=43 // pred_fallthru
          _
      $region44: #{tpu_custom_call.1} parent=5 // pred_fallthru
        _
      %p274 = scmp.le.s32.totalorder 1, %s18
      %p275 = scmp.lt.s32.totalorder %s18, 3
      %p276 = pnand %p274, %p275
      %p277 = pneg %p276
      // Predicated region
      $region49: #{tpu_custom_call.1} parent=5 // pred_check
        _
      $region50: #{tpu_custom_call.1} parent=5 // pred_check_branch
        %279 = sbr.rel (%p276) target = $region52
      $region51: #{tpu_custom_call.1} parent=5 // pred_region
        %s280 = ssub.s32 %s18, 1
        // Predicated region
        $region53: #{tpu_custom_call.1} parent=51 // pred_check
          %p281 = pneg %p102
        $region54: #{tpu_custom_call.1} parent=51 // pred_check_branch
          %283 = sbr.rel (%p281) target = $region56
        $region55: #{tpu_custom_call.1} parent=51 // pred_region
          %284 = dma.done [#allocation3], 1024
        $region56: #{tpu_custom_call.1} parent=51 // pred_fallthru
          _
        %p285 = pneg %p39
        %p286 = pneg %p36
        %p287 = pneg %p60
        %p288 = pneg %p57
        %p289 = pneg %p81
        %p290 = pneg %p78
        %p291 = pneg %p102
        %p292 = pneg %p99
        %p293 = pneg %p123
        %p294 = pneg %p120
        %p295 = pneg %p144
        %p296 = pneg %p141
        %p297 = pneg %p165
        %p298 = pneg %p162
        %p299 = scmp.lt.s32.totalorder %s23, 1
        %s300 = scalar_select %p299, %s23, 1
        %s301 = smul.addr %s300, 4
        %s302 = scalar_lea.vmem %s7, %s301
        %p303 = pneg %p191
        %p304 = pneg %p188
        %p305 = pneg %p217
        %p306 = pneg %p214
        %s307 = sand.u32 %s204, 1
        %s308 = scalar_lea.sflag [#allocation4], %s307
        %s309 = sand.u32 %s204, 1
        %s310 = smul.addr %s309, 8
        %s311 = scalar_lea.vmem [#allocation5], %s310
        %p312 = scmp.lt.s32.totalorder %s23, 1
        %s313 = scalar_select %p312, %s23, 1
        %s314 = smul.addr %s313, 4
        %s315 = scalar_lea.vmem %s7, %s314
        %v316 = vld [vmem:[%s0] sm:$0xff]
        %v317 = vld [vmem:[%s0 + $0x8] sm:$0xff]
        %v318 = vld [vmem:[%s0 + $0x10] sm:$0xff]
        %v319 = vld [vmem:[%s0 + $0x18] sm:$0xff]
        %v320 = vld [vmem:[%s0 + $0x20] sm:$0xff]
        %v321 = vld [vmem:[%s0 + $0x28] sm:$0xff]
        %v322 = vld [vmem:[%s0 + $0x30] sm:$0xff]
        %v323 = vld [vmem:[%s0 + $0x38] sm:$0xff]
        %v324 = vld [vmem:[%s0 + $0x40] sm:$0xff]
        %v325 = vld [vmem:[%s0 + $0x48] sm:$0xff]
        %v326 = vld [vmem:[%s0 + $0x50] sm:$0xff]
        %v327 = vld [vmem:[%s0 + $0x58] sm:$0xff]
        %v328 = vld [vmem:[%s0 + $0x60] sm:$0xff]
        %v329 = vld [vmem:[%s0 + $0x68] sm:$0xff]
        %v330 = vld [vmem:[%s0 + $0x70] sm:$0xff]
        %v331 = vld [vmem:[%s0 + $0x78] sm:$0xff]
        %v332 = vld [vmem:[%s315] sm:$0xf]
        %v333 = vld [vmem:[%s1] sm:$0xff]
        %v334 = vld [vmem:[%s1 + $0x8] sm:$0xff]
        %v335 = vld [vmem:[%s1 + $0x10] sm:$0xff]
        %v336 = vld [vmem:[%s1 + $0x18] sm:$0xff]
        %337 = vmatprep.subr.mxu0 0.0
        %338 = vmatpush1.msra.mxu0 %v331
        %339 = vmatprep.subr.mxu0 0.0
        %340 = vmatpush1.msra.mxu0 %v330
        %341 = vmatprep.subr.mxu0 0.0
        %342 = vmatpush1.msra.mxu0 %v329
        %343 = vmatprep.subr.mxu0 0.0
        %344 = vmatpush1.msra.mxu0 %v328
        %345 = vmatprep.subr.mxu0 0.0
        %346 = vmatpush1.msra.mxu0 %v327
        %347 = vmatprep.subr.mxu0 0.0
        %348 = vmatpush1.msra.mxu0 %v326
        %349 = vmatprep.subr.mxu0 0.0
        %350 = vmatpush1.msra.mxu0 %v325
        %351 = vmatprep.subr.mxu0 0.0
        %352 = vmatpush1.msra.mxu0 %v324
        %353 = vmatprep.subr.mxu0 0.0
        %354 = vmatpush1.msra.mxu0 %v323
        %355 = vmatprep.subr.mxu0 0.0
        %356 = vmatpush1.msra.mxu0 %v322
        %357 = vmatprep.subr.mxu0 0.0
        %358 = vmatpush1.msra.mxu0 %v321
        %359 = vmatprep.subr.mxu0 0.0
        %360 = vmatpush1.msra.mxu0 %v320
        %361 = vmatprep.subr.mxu0 0.0
        %362 = vmatpush1.msra.mxu0 %v319
        %363 = vmatprep.subr.mxu0 0.0
        %364 = vmatpush1.msra.mxu0 %v318
        %365 = vmatprep.subr.mxu0 0.0
        %366 = vmatpush1.msra.mxu0 %v317
        %367 = vmatprep.subr.mxu0 0.0
        %368 = vmatpush1.msra.mxu0 %v316
        %369 = vmatprep.subr.mxu0 0.0
        %370 = vmatpush2.msra.mxu0 0.0
        %371 = vmatprep.subr.mxu0 0.0
        %372 = vmatpush2.msra.mxu0 0.0
        %373 = vmatprep.subr.mxu0 0.0
        %374 = vmatpush2.msra.mxu0 0.0
        %375 = vmatprep.subr.mxu0 0.0
        %376 = vmatpush2.msra.mxu0 0.0
        %377 = vmatprep.subr.mxu0 0.0
        %378 = vmatpush2.msra.mxu0 0.0
        %379 = vmatprep.subr.mxu0 0.0
        %380 = vmatpush2.msra.mxu0 0.0
        %381 = vmatprep.subr.mxu0 0.0
        %382 = vmatpush2.msra.mxu0 0.0
        %383 = vmatprep.subr.mxu0 0.0
        %384 = vmatpush2.msra.mxu0 0.0
        %385 = vmatprep.subr.mxu0 0.0
        %386 = vmatpush2.msra.mxu0 0.0
        %387 = vmatprep.subr.mxu0 0.0
        %388 = vmatpush2.msra.mxu0 0.0
        %389 = vmatprep.subr.mxu0 0.0
        %390 = vmatpush2.msra.mxu0 0.0
        %391 = vmatprep.subr.mxu0 0.0
        %392 = vmatpush2.msra.mxu0 0.0
        %393 = vmatprep.subr.mxu0 0.0
        %394 = vmatpush2.msra.mxu0 0.0
        %395 = vmatprep.subr.mxu0 0.0
        %396 = vmatpush2.msra.mxu0 0.0
        %397 = vmatprep.subr.mxu0 0.0
        %398 = vmatpush2.msra.mxu0 0.0
        %399 = vmatprep.subr.mxu0 0.0
        %400 = vmatpush2.msra.mxu0 0.0
        %401 = vmatprep.mubr.f32.mxu0 0.0
        %402 = vmatmul.mubr.f32.gmra.mxu0 %v332
        %v403 = vpop.f32.mrf.mxu0
        %v404 = vadd.f32 0.0, %v403
        %v405 = vpop.f32.mrf.mxu0
        %406 = vdwg.mxu0
        %s407 = scalar_lea.vmem %s1, 32
        %v408 = vld [vmem:[%s407] sm:$0xff]
        %v409 = vld [vmem:[%s407 + $0x8] sm:$0xff]
        %v410 = vld [vmem:[%s407 + $0x10] sm:$0xff]
        %v411 = vld [vmem:[%s407 + $0x18] sm:$0xff]
        %vm412 = vcmask 31744
        %v414 = vsel %vm412, %v408, 0
        %v417 = vsel %vm412, %v409, 0
        %v420 = vsel %vm412, %v410, 0
        %v423 = vsel %vm412, %v411, 0
        %vm425 = vcmask 1043456
        %v427 = vsel %vm425, %v404, 0
        %429 = vmatprep.subr.mxu0 0.0
        %430 = vmatpush1.msra.mxu0 0.0
        %431 = vmatprep.subr.mxu0 0.0
        %432 = vmatpush1.msra.mxu0 0.0
        %433 = vmatprep.subr.mxu0 0.0
        %434 = vmatpush1.msra.mxu0 0.0
        %435 = vmatprep.subr.mxu0 0.0
        %436 = vmatpush1.msra.mxu0 0.0
        %437 = vmatprep.subr.mxu0 0.0
        %438 = vmatpush1.msra.mxu0 0.0
        %439 = vmatprep.subr.mxu0 0.0
        %440 = vmatpush1.msra.mxu0 0.0
        %441 = vmatprep.subr.mxu0 0.0
        %442 = vmatpush1.msra.mxu0 0.0
        %443 = vmatprep.subr.mxu0 0.0
        %444 = vmatpush1.msra.mxu0 0.0
        %445 = vmatprep.subr.mxu0 0.0
        %446 = vmatpush1.msra.mxu0 0.0
        %447 = vmatprep.subr.mxu0 0.0
        %448 = vmatpush1.msra.mxu0 0.0
        %449 = vmatprep.subr.mxu0 0.0
        %450 = vmatpush1.msra.mxu0 0.0
        %451 = vmatprep.subr.mxu0 0.0
        %452 = vmatpush1.msra.mxu0 0.0
        %453 = vmatprep.subr.mxu0 0.0
        %454 = vmatpush1.msra.mxu0 0.0
        %455 = vmatprep.subr.mxu0 0.0
        %456 = vmatpush1.msra.mxu0 0.0
        %457 = vmatprep.subr.mxu0 0.0
        %458 = vmatpush1.msra.mxu0 0.0
        %459 = vmatprep.subr.mxu0 0.0
        %460 = vmatpush1.msra.mxu0 %v427
        %461 = vmatprep.subr.mxu0 0.0
        %462 = vmatpush2.msra.mxu0 0.0
        %463 = vmatprep.subr.mxu0 0.0
        %464 = vmatpush2.msra.mxu0 0.0
        %465 = vmatprep.subr.mxu0 0.0
        %466 = vmatpush2.msra.mxu0 0.0
        %467 = vmatprep.subr.mxu0 0.0
        %468 = vmatpush2.msra.mxu0 0.0
        %469 = vmatprep.subr.mxu0 0.0
        %470 = vmatpush2.msra.mxu0 0.0
        %471 = vmatprep.subr.mxu0 0.0
        %472 = vmatpush2.msra.mxu0 0.0
        %473 = vmatprep.subr.mxu0 0.0
        %474 = vmatpush2.msra.mxu0 0.0
        %475 = vmatprep.subr.mxu0 0.0
        %476 = vmatpush2.msra.mxu0 0.0
        %477 = vmatprep.subr.mxu0 0.0
        %478 = vmatpush2.msra.mxu0 0.0
        %479 = vmatprep.subr.mxu0 0.0
        %480 = vmatpush2.msra.mxu0 0.0
        %481 = vmatprep.subr.mxu0 0.0
        %482 = vmatpush2.msra.mxu0 0.0
        %483 = vmatprep.subr.mxu0 0.0
        %484 = vmatpush2.msra.mxu0 0.0
        %485 = vmatprep.subr.mxu0 0.0
        %486 = vmatpush2.msra.mxu0 0.0
        %487 = vmatprep.subr.mxu0 0.0
        %488 = vmatpush2.msra.mxu0 0.0
        %489 = vmatprep.subr.mxu0 0.0
        %490 = vmatpush2.msra.mxu0 0.0
        %491 = vmatprep.subr.mxu0 0.0
        %492 = vmatpush2.msra.mxu0 0.0
        %493 = vmatprep.mubr.f32.mxu0 0.0
        %494 = vmatmul.mubr.f32.gmra.mxu0 %v414
        %v495 = vpop.f32.mrf.mxu0
        %v496 = vadd.f32 0.0, %v495
        %v497 = vpop.f32.mrf.mxu0
        %498 = vmatprep.mubr.f32.mxu0 0.0
        %499 = vmatmul.mubr.f32.gmra.mxu0 %v417
        %v500 = vpop.f32.mrf.mxu0
        %v501 = vadd.f32 0.0, %v500
        %v502 = vpop.f32.mrf.mxu0
        %503 = vmatprep.mubr.f32.mxu0 0.0
        %504 = vmatmul.mubr.f32.gmra.mxu0 %v420
        %v505 = vpop.f32.mrf.mxu0
        %v506 = vadd.f32 0.0, %v505
        %v507 = vpop.f32.mrf.mxu0
        %508 = vmatprep.mubr.f32.mxu0 0.0
        %509 = vmatmul.mubr.f32.gmra.mxu0 %v423
        %v510 = vpop.f32.mrf.mxu0
        %v511 = vadd.f32 0.0, %v510
        %v512 = vpop.f32.mrf.mxu0
        %513 = vdwg.mxu0
        %v515 = vsel %vm412, %v333, 0
        %v518 = vsel %vm412, %v334, 0
        %v521 = vsel %vm412, %v335, 0
        %v524 = vsel %vm412, %v336, 0
        %v527 = vsel %vm425, %v332, 0
        %529 = vmatprep.subr.mxu0 0.0
        %530 = vmatpush1.msra.mxu0 0.0
        %531 = vmatprep.subr.mxu0 0.0
        %532 = vmatpush1.msra.mxu0 0.0
        %533 = vmatprep.subr.mxu0 0.0
        %534 = vmatpush1.msra.mxu0 0.0
        %535 = vmatprep.subr.mxu0 0.0
        %536 = vmatpush1.msra.mxu0 0.0
        %537 = vmatprep.subr.mxu0 0.0
        %538 = vmatpush1.msra.mxu0 0.0
        %539 = vmatprep.subr.mxu0 0.0
        %540 = vmatpush1.msra.mxu0 0.0
        %541 = vmatprep.subr.mxu0 0.0
        %542 = vmatpush1.msra.mxu0 0.0
        %543 = vmatprep.subr.mxu0 0.0
        %544 = vmatpush1.msra.mxu0 0.0
        %545 = vmatprep.subr.mxu0 0.0
        %546 = vmatpush1.msra.mxu0 0.0
        %547 = vmatprep.subr.mxu0 0.0
        %548 = vmatpush1.msra.mxu0 0.0
        %549 = vmatprep.subr.mxu0 0.0
        %550 = vmatpush1.msra.mxu0 0.0
        %551 = vmatprep.subr.mxu0 0.0
        %552 = vmatpush1.msra.mxu0 0.0
        %553 = vmatprep.subr.mxu0 0.0
        %554 = vmatpush1.msra.mxu0 0.0
        %555 = vmatprep.subr.mxu0 0.0
        %556 = vmatpush1.msra.mxu0 0.0
        %557 = vmatprep.subr.mxu0 0.0
        %558 = vmatpush1.msra.mxu0 0.0
        %559 = vmatprep.subr.mxu0 0.0
        %560 = vmatpush1.msra.mxu0 %v527
        %561 = vmatprep.subr.mxu0 0.0
        %562 = vmatpush2.msra.mxu0 0.0
        %563 = vmatprep.subr.mxu0 0.0
        %564 = vmatpush2.msra.mxu0 0.0
        %565 = vmatprep.subr.mxu0 0.0
        %566 = vmatpush2.msra.mxu0 0.0
        %567 = vmatprep.subr.mxu0 0.0
        %568 = vmatpush2.msra.mxu0 0.0
        %569 = vmatprep.subr.mxu0 0.0
        %570 = vmatpush2.msra.mxu0 0.0
        %571 = vmatprep.subr.mxu0 0.0
        %572 = vmatpush2.msra.mxu0 0.0
        %573 = vmatprep.subr.mxu0 0.0
        %574 = vmatpush2.msra.mxu0 0.0
        %575 = vmatprep.subr.mxu0 0.0
        %576 = vmatpush2.msra.mxu0 0.0
        %577 = vmatprep.subr.mxu0 0.0
        %578 = vmatpush2.msra.mxu0 0.0
        %579 = vmatprep.subr.mxu0 0.0
        %580 = vmatpush2.msra.mxu0 0.0
        %581 = vmatprep.subr.mxu0 0.0
        %582 = vmatpush2.msra.mxu0 0.0
        %583 = vmatprep.subr.mxu0 0.0
        %584 = vmatpush2.msra.mxu0 0.0
        %585 = vmatprep.subr.mxu0 0.0
        %586 = vmatpush2.msra.mxu0 0.0
        %587 = vmatprep.subr.mxu0 0.0
        %588 = vmatpush2.msra.mxu0 0.0
        %589 = vmatprep.subr.mxu0 0.0
        %590 = vmatpush2.msra.mxu0 0.0
        %591 = vmatprep.subr.mxu0 0.0
        %592 = vmatpush2.msra.mxu0 0.0
        %593 = vmatprep.mubr.f32.mxu0 0.0
        %594 = vmatmul.mubr.f32.gmra.mxu0 %v515
        %v595 = vpop.f32.mrf.mxu0
        %v596 = vadd.f32 %v496, %v595
        %v597 = vpop.f32.mrf.mxu0
        %598 = vmatprep.mubr.f32.mxu0 0.0
        %599 = vmatmul.mubr.f32.gmra.mxu0 %v518
        %v600 = vpop.f32.mrf.mxu0
        %v601 = vadd.f32 %v501, %v600
        %v602 = vpop.f32.mrf.mxu0
        %603 = vmatprep.mubr.f32.mxu0 0.0
        %604 = vmatmul.mubr.f32.gmra.mxu0 %v521
        %v605 = vpop.f32.mrf.mxu0
        %v606 = vadd.f32 %v506, %v605
        %v607 = vpop.f32.mrf.mxu0
        %608 = vmatprep.mubr.f32.mxu0 0.0
        %609 = vmatmul.mubr.f32.gmra.mxu0 %v524
        %v610 = vpop.f32.mrf.mxu0
        %v611 = vadd.f32 %v511, %v610
        %v612 = vpop.f32.mrf.mxu0
        %613 = vdwg.mxu0
        %614 = vmatprep.subr.mxu0 0.0
        %615 = vmatpush1.msra.mxu0 %v331
        %616 = vmatprep.subr.mxu0 0.0
        %617 = vmatpush1.msra.mxu0 %v330
        %618 = vmatprep.subr.mxu0 0.0
        %619 = vmatpush1.msra.mxu0 %v329
        %620 = vmatprep.subr.mxu0 0.0
        %621 = vmatpush1.msra.mxu0 %v328
        %622 = vmatprep.subr.mxu0 0.0
        %623 = vmatpush1.msra.mxu0 %v327
        %624 = vmatprep.subr.mxu0 0.0
        %625 = vmatpush1.msra.mxu0 %v326
        %626 = vmatprep.subr.mxu0 0.0
        %627 = vmatpush1.msra.mxu0 %v325
        %628 = vmatprep.subr.mxu0 0.0
        %629 = vmatpush1.msra.mxu0 %v324
        %630 = vmatprep.subr.mxu0 0.0
        %631 = vmatpush1.msra.mxu0 %v323
        %632 = vmatprep.subr.mxu0 0.0
        %633 = vmatpush1.msra.mxu0 %v322
        %634 = vmatprep.subr.mxu0 0.0
        %635 = vmatpush1.msra.mxu0 %v321
        %636 = vmatprep.subr.mxu0 0.0
        %637 = vmatpush1.msra.mxu0 %v320
        %638 = vmatprep.subr.mxu0 0.0
        %639 = vmatpush1.msra.mxu0 %v319
        %640 = vmatprep.subr.mxu0 0.0
        %641 = vmatpush1.msra.mxu0 %v318
        %642 = vmatprep.subr.mxu0 0.0
        %643 = vmatpush1.msra.mxu0 %v317
        %644 = vmatprep.subr.mxu0 0.0
        %645 = vmatpush1.msra.mxu0 %v316
        %646 = vmatprep.subr.mxu0 0.0
        %647 = vmatpush2.msra.mxu0 0.0
        %648 = vmatprep.subr.mxu0 0.0
        %649 = vmatpush2.msra.mxu0 0.0
        %650 = vmatprep.subr.mxu0 0.0
        %651 = vmatpush2.msra.mxu0 0.0
        %652 = vmatprep.subr.mxu0 0.0
        %653 = vmatpush2.msra.mxu0 0.0
        %654 = vmatprep.subr.mxu0 0.0
        %655 = vmatpush2.msra.mxu0 0.0
        %656 = vmatprep.subr.mxu0 0.0
        %657 = vmatpush2.msra.mxu0 0.0
        %658 = vmatprep.subr.mxu0 0.0
        %659 = vmatpush2.msra.mxu0 0.0
        %660 = vmatprep.subr.mxu0 0.0
        %661 = vmatpush2.msra.mxu0 0.0
        %662 = vmatprep.subr.mxu0 0.0
        %663 = vmatpush2.msra.mxu0 0.0
        %664 = vmatprep.subr.mxu0 0.0
        %665 = vmatpush2.msra.mxu0 0.0
        %666 = vmatprep.subr.mxu0 0.0
        %667 = vmatpush2.msra.mxu0 0.0
        %668 = vmatprep.subr.mxu0 0.0
        %669 = vmatpush2.msra.mxu0 0.0
        %670 = vmatprep.subr.mxu0 0.0
        %671 = vmatpush2.msra.mxu0 0.0
        %672 = vmatprep.subr.mxu0 0.0
        %673 = vmatpush2.msra.mxu0 0.0
        %674 = vmatprep.subr.mxu0 0.0
        %675 = vmatpush2.msra.mxu0 0.0
        %676 = vmatprep.subr.mxu0 0.0
        %677 = vmatpush2.msra.mxu0 0.0
        %678 = vmatprep.mubr.f32.mxu0 0.0
        %679 = vmatmul.mubr.f32.gmra.mxu0 %v404
        %v680 = vpop.f32.mrf.mxu0
        %v681 = vadd.f32 0.0, %v680
        %v682 = vpop.f32.mrf.mxu0
        %683 = vdwg.mxu0
        %s684 = scalar_lea.vmem %s1, 64
        %v685 = vld [vmem:[%s684] sm:$0xff]
        %v686 = vld [vmem:[%s684 + $0x8] sm:$0xff]
        %v687 = vld [vmem:[%s684 + $0x10] sm:$0xff]
        %v688 = vld [vmem:[%s684 + $0x18] sm:$0xff]
        %v690 = vsel %vm412, %v685, 0
        %v693 = vsel %vm412, %v686, 0
        %v696 = vsel %vm412, %v687, 0
        %v699 = vsel %vm412, %v688, 0
        %v702 = vsel %vm425, %v681, 0
        %704 = vmatprep.subr.mxu0 0.0
        %705 = vmatpush1.msra.mxu0 0.0
        %706 = vmatprep.subr.mxu0 0.0
        %707 = vmatpush1.msra.mxu0 0.0
        %708 = vmatprep.subr.mxu0 0.0
        %709 = vmatpush1.msra.mxu0 0.0
        %710 = vmatprep.subr.mxu0 0.0
        %711 = vmatpush1.msra.mxu0 0.0
        %712 = vmatprep.subr.mxu0 0.0
        %713 = vmatpush1.msra.mxu0 0.0
        %714 = vmatprep.subr.mxu0 0.0
        %715 = vmatpush1.msra.mxu0 0.0
        %716 = vmatprep.subr.mxu0 0.0
        %717 = vmatpush1.msra.mxu0 0.0
        %718 = vmatprep.subr.mxu0 0.0
        %719 = vmatpush1.msra.mxu0 0.0
        %720 = vmatprep.subr.mxu0 0.0
        %721 = vmatpush1.msra.mxu0 0.0
        %722 = vmatprep.subr.mxu0 0.0
        %723 = vmatpush1.msra.mxu0 0.0
        %724 = vmatprep.subr.mxu0 0.0
        %725 = vmatpush1.msra.mxu0 0.0
        %726 = vmatprep.subr.mxu0 0.0
        %727 = vmatpush1.msra.mxu0 0.0
        %728 = vmatprep.subr.mxu0 0.0
        %729 = vmatpush1.msra.mxu0 0.0
        %730 = vmatprep.subr.mxu0 0.0
        %731 = vmatpush1.msra.mxu0 0.0
        %732 = vmatprep.subr.mxu0 0.0
        %733 = vmatpush1.msra.mxu0 0.0
        %734 = vmatprep.subr.mxu0 0.0
        %735 = vmatpush1.msra.mxu0 %v702
        %736 = vmatprep.subr.mxu0 0.0
        %737 = vmatpush2.msra.mxu0 0.0
        %738 = vmatprep.subr.mxu0 0.0
        %739 = vmatpush2.msra.mxu0 0.0
        %740 = vmatprep.subr.mxu0 0.0
        %741 = vmatpush2.msra.mxu0 0.0
        %742 = vmatprep.subr.mxu0 0.0
        %743 = vmatpush2.msra.mxu0 0.0
        %744 = vmatprep.subr.mxu0 0.0
        %745 = vmatpush2.msra.mxu0 0.0
        %746 = vmatprep.subr.mxu0 0.0
        %747 = vmatpush2.msra.mxu0 0.0
        %748 = vmatprep.subr.mxu0 0.0
        %749 = vmatpush2.msra.mxu0 0.0
        %750 = vmatprep.subr.mxu0 0.0
        %751 = vmatpush2.msra.mxu0 0.0
        %752 = vmatprep.subr.mxu0 0.0
        %753 = vmatpush2.msra.mxu0 0.0
        %754 = vmatprep.subr.mxu0 0.0
        %755 = vmatpush2.msra.mxu0 0.0
        %756 = vmatprep.subr.mxu0 0.0
        %757 = vmatpush2.msra.mxu0 0.0
        %758 = vmatprep.subr.mxu0 0.0
        %759 = vmatpush2.msra.mxu0 0.0
        %760 = vmatprep.subr.mxu0 0.0
        %761 = vmatpush2.msra.mxu0 0.0
        %762 = vmatprep.subr.mxu0 0.0
        %763 = vmatpush2.msra.mxu0 0.0
        %764 = vmatprep.subr.mxu0 0.0
        %765 = vmatpush2.msra.mxu0 0.0
        %766 = vmatprep.subr.mxu0 0.0
        %767 = vmatpush2.msra.mxu0 0.0
        %768 = vmatprep.mubr.f32.mxu0 0.0
        %769 = vmatmul.mubr.f32.gmra.mxu0 %v690
        %v770 = vpop.f32.mrf.mxu0
        %v771 = vadd.f32 0.0, %v770
        %v772 = vpop.f32.mrf.mxu0
        %773 = vmatprep.mubr.f32.mxu0 0.0
        %774 = vmatmul.mubr.f32.gmra.mxu0 %v693
        %v775 = vpop.f32.mrf.mxu0
        %v776 = vadd.f32 0.0, %v775
        %v777 = vpop.f32.mrf.mxu0
        %778 = vmatprep.mubr.f32.mxu0 0.0
        %779 = vmatmul.mubr.f32.gmra.mxu0 %v696
        %v780 = vpop.f32.mrf.mxu0
        %v781 = vadd.f32 0.0, %v780
        %v782 = vpop.f32.mrf.mxu0
        %783 = vmatprep.mubr.f32.mxu0 0.0
        %784 = vmatmul.mubr.f32.gmra.mxu0 %v699
        %v785 = vpop.f32.mrf.mxu0
        %v786 = vadd.f32 0.0, %v785
        %v787 = vpop.f32.mrf.mxu0
        %788 = vdwg.mxu0
        %v789 = vadd.f32 %v596, %v771
        %v790 = vadd.f32 %v601, %v776
        %v791 = vadd.f32 %v606, %v781
        %v792 = vadd.f32 %v611, %v786
        %v793 = vld [vmem:[%s2] sm:$0xff]
        %v794 = vld [vmem:[%s2 + $0x8] sm:$0xff]
        %v795 = vld [vmem:[%s2 + $0x10] sm:$0xff]
        %v796 = vld [vmem:[%s2 + $0x18] sm:$0xff]
        %798 = vset.pattern.permute.xlu0 0
        %799 = vperm.xlu0 %798, %v793
        %v800 = vpop.permute.xlu0 %799
        %803 = vset.pattern.permute.xlu0 0
        %804 = vperm.xlu0 %803, %v794
        %v805 = vpop.permute.xlu0 %804
        %808 = vset.pattern.permute.xlu0 0
        %809 = vperm.xlu0 %808, %v795
        %v810 = vpop.permute.xlu0 %809
        %813 = vset.pattern.permute.xlu0 0
        %814 = vperm.xlu0 %813, %v796
        %v815 = vpop.permute.xlu0 %814
        %v817 = vadd.f32 %v789, %v800
        %v818 = vadd.f32 %v790, %v805
        %v819 = vadd.f32 %v791, %v810
        %v820 = vadd.f32 %v792, %v815
        %v821 = vmax.f32 %v817, 0.0
        %v822 = vmax.f32 %v818, 0.0
        %v823 = vmax.f32 %v819, 0.0
        %v824 = vmax.f32 %v820, 0.0
        %v825 = vld [vmem:[#allocation2] sm:$0xff]
        %v826 = vld [vmem:[#allocation2 + $0x8] sm:$0xff]
        %v827 = vld [vmem:[#allocation2 + $0x10] sm:$0xff]
        %v828 = vld [vmem:[#allocation2 + $0x18] sm:$0xff]
        %829 = vmatprep.subr.mxu0 0.0
        %830 = vmatpush1.msra.mxu0 %v331
        %831 = vmatprep.subr.mxu0 0.0
        %832 = vmatpush1.msra.mxu0 %v330
        %833 = vmatprep.subr.mxu0 0.0
        %834 = vmatpush1.msra.mxu0 %v329
        %835 = vmatprep.subr.mxu0 0.0
        %836 = vmatpush1.msra.mxu0 %v328
        %837 = vmatprep.subr.mxu0 0.0
        %838 = vmatpush1.msra.mxu0 %v327
        %839 = vmatprep.subr.mxu0 0.0
        %840 = vmatpush1.msra.mxu0 %v326
        %841 = vmatprep.subr.mxu0 0.0
        %842 = vmatpush1.msra.mxu0 %v325
        %843 = vmatprep.subr.mxu0 0.0
        %844 = vmatpush1.msra.mxu0 %v324
        %845 = vmatprep.subr.mxu0 0.0
        %846 = vmatpush1.msra.mxu0 %v323
        %847 = vmatprep.subr.mxu0 0.0
        %848 = vmatpush1.msra.mxu0 %v322
        %849 = vmatprep.subr.mxu0 0.0
        %850 = vmatpush1.msra.mxu0 %v321
        %851 = vmatprep.subr.mxu0 0.0
        %852 = vmatpush1.msra.mxu0 %v320
        %853 = vmatprep.subr.mxu0 0.0
        %854 = vmatpush1.msra.mxu0 %v319
        %855 = vmatprep.subr.mxu0 0.0
        %856 = vmatpush1.msra.mxu0 %v318
        %857 = vmatprep.subr.mxu0 0.0
        %858 = vmatpush1.msra.mxu0 %v317
        %859 = vmatprep.subr.mxu0 0.0
        %860 = vmatpush1.msra.mxu0 %v316
        %861 = vmatprep.subr.mxu0 0.0
        %862 = vmatpush2.msra.mxu0 0.0
        %863 = vmatprep.subr.mxu0 0.0
        %864 = vmatpush2.msra.mxu0 0.0
        %865 = vmatprep.subr.mxu0 0.0
        %866 = vmatpush2.msra.mxu0 0.0
        %867 = vmatprep.subr.mxu0 0.0
        %868 = vmatpush2.msra.mxu0 0.0
        %869 = vmatprep.subr.mxu0 0.0
        %870 = vmatpush2.msra.mxu0 0.0
        %871 = vmatprep.subr.mxu0 0.0
        %872 = vmatpush2.msra.mxu0 0.0
        %873 = vmatprep.subr.mxu0 0.0
        %874 = vmatpush2.msra.mxu0 0.0
        %875 = vmatprep.subr.mxu0 0.0
        %876 = vmatpush2.msra.mxu0 0.0
        %877 = vmatprep.subr.mxu0 0.0
        %878 = vmatpush2.msra.mxu0 0.0
        %879 = vmatprep.subr.mxu0 0.0
        %880 = vmatpush2.msra.mxu0 0.0
        %881 = vmatprep.subr.mxu0 0.0
        %882 = vmatpush2.msra.mxu0 0.0
        %883 = vmatprep.subr.mxu0 0.0
        %884 = vmatpush2.msra.mxu0 0.0
        %885 = vmatprep.subr.mxu0 0.0
        %886 = vmatpush2.msra.mxu0 0.0
        %887 = vmatprep.subr.mxu0 0.0
        %888 = vmatpush2.msra.mxu0 0.0
        %889 = vmatprep.subr.mxu0 0.0
        %890 = vmatpush2.msra.mxu0 0.0
        %891 = vmatprep.subr.mxu0 0.0
        %892 = vmatpush2.msra.mxu0 0.0
        %893 = vmatprep.mubr.f32.mxu0 0.0
        %894 = vmatmul.mubr.f32.gmra.mxu0 %v821
        %v895 = vpop.f32.mrf.mxu0
        %v896 = vadd.f32 0.0, %v895
        %v897 = vpop.f32.mrf.mxu0
        %898 = vmatprep.mubr.f32.mxu0 0.0
        %899 = vmatmul.mubr.f32.gmra.mxu0 %v822
        %v900 = vpop.f32.mrf.mxu0
        %v901 = vadd.f32 0.0, %v900
        %v902 = vpop.f32.mrf.mxu0
        %903 = vmatprep.mubr.f32.mxu0 0.0
        %904 = vmatmul.mubr.f32.gmra.mxu0 %v823
        %v905 = vpop.f32.mrf.mxu0
        %v906 = vadd.f32 0.0, %v905
        %v907 = vpop.f32.mrf.mxu0
        %908 = vmatprep.mubr.f32.mxu0 0.0
        %909 = vmatmul.mubr.f32.gmra.mxu0 %v824
        %v910 = vpop.f32.mrf.mxu0
        %v911 = vadd.f32 0.0, %v910
        %v912 = vpop.f32.mrf.mxu0
        %913 = vdwg.mxu0
        %s914 = scalar_lea.vmem [#allocation2], 32
        %v915 = vld [vmem:[%s914] sm:$0xff]
        %v916 = vld [vmem:[%s914 + $0x8] sm:$0xff]
        %v917 = vld [vmem:[%s914 + $0x10] sm:$0xff]
        %v918 = vld [vmem:[%s914 + $0x18] sm:$0xff]
        %vm919 = vcmask 261120
        %v921 = vsel %vm919, %v915, 0
        %v924 = vsel %vm919, %v916, 0
        %v927 = vsel %vm919, %v917, 0
        %v930 = vsel %vm919, %v918, 0
        %932 = vmatprep.subr.mxu0 0.0
        %933 = vmatpush1.msra.mxu0 0.0
        %934 = vmatprep.subr.mxu0 0.0
        %935 = vmatpush1.msra.mxu0 0.0
        %936 = vmatprep.subr.mxu0 0.0
        %937 = vmatpush1.msra.mxu0 0.0
        %938 = vmatprep.subr.mxu0 0.0
        %939 = vmatpush1.msra.mxu0 0.0
        %940 = vmatprep.subr.mxu0 0.0
        %941 = vmatpush1.msra.mxu0 0.0
        %942 = vmatprep.subr.mxu0 0.0
        %943 = vmatpush1.msra.mxu0 0.0
        %944 = vmatprep.subr.mxu0 0.0
        %945 = vmatpush1.msra.mxu0 0.0
        %946 = vmatprep.subr.mxu0 0.0
        %947 = vmatpush1.msra.mxu0 0.0
        %948 = vmatprep.subr.mxu0 0.0
        %949 = vmatpush1.msra.mxu0 0.0
        %950 = vmatprep.subr.mxu0 0.0
        %951 = vmatpush1.msra.mxu0 0.0
        %952 = vmatprep.subr.mxu0 0.0
        %953 = vmatpush1.msra.mxu0 0.0
        %954 = vmatprep.subr.mxu0 0.0
        %955 = vmatpush1.msra.mxu0 0.0
        %956 = vmatprep.subr.mxu0 0.0
        %957 = vmatpush1.msra.mxu0 %v911
        %958 = vmatprep.subr.mxu0 0.0
        %959 = vmatpush1.msra.mxu0 %v906
        %960 = vmatprep.subr.mxu0 0.0
        %961 = vmatpush1.msra.mxu0 %v901
        %962 = vmatprep.subr.mxu0 0.0
        %963 = vmatpush1.msra.mxu0 %v896
        %964 = vmatprep.subr.mxu0 0.0
        %965 = vmatpush2.msra.mxu0 0.0
        %966 = vmatprep.subr.mxu0 0.0
        %967 = vmatpush2.msra.mxu0 0.0
        %968 = vmatprep.subr.mxu0 0.0
        %969 = vmatpush2.msra.mxu0 0.0
        %970 = vmatprep.subr.mxu0 0.0
        %971 = vmatpush2.msra.mxu0 0.0
        %972 = vmatprep.subr.mxu0 0.0
        %973 = vmatpush2.msra.mxu0 0.0
        %974 = vmatprep.subr.mxu0 0.0
        %975 = vmatpush2.msra.mxu0 0.0
        %976 = vmatprep.subr.mxu0 0.0
        %977 = vmatpush2.msra.mxu0 0.0
        %978 = vmatprep.subr.mxu0 0.0
        %979 = vmatpush2.msra.mxu0 0.0
        %980 = vmatprep.subr.mxu0 0.0
        %981 = vmatpush2.msra.mxu0 0.0
        %982 = vmatprep.subr.mxu0 0.0
        %983 = vmatpush2.msra.mxu0 0.0
        %984 = vmatprep.subr.mxu0 0.0
        %985 = vmatpush2.msra.mxu0 0.0
        %986 = vmatprep.subr.mxu0 0.0
        %987 = vmatpush2.msra.mxu0 0.0
        %988 = vmatprep.subr.mxu0 0.0
        %989 = vmatpush2.msra.mxu0 0.0
        %990 = vmatprep.subr.mxu0 0.0
        %991 = vmatpush2.msra.mxu0 0.0
        %992 = vmatprep.subr.mxu0 0.0
        %993 = vmatpush2.msra.mxu0 0.0
        %994 = vmatprep.subr.mxu0 0.0
        %995 = vmatpush2.msra.mxu0 0.0
        %996 = vmatprep.mubr.f32.mxu0 0.0
        %997 = vmatmul.mubr.f32.gmra.mxu0 %v921
        %v998 = vpop.f32.mrf.mxu0
        %v999 = vadd.f32 0.0, %v998
        %v1000 = vpop.f32.mrf.mxu0
        %1001 = vmatprep.mubr.f32.mxu0 0.0
        %1002 = vmatmul.mubr.f32.gmra.mxu0 %v924
        %v1003 = vpop.f32.mrf.mxu0
        %v1004 = vadd.f32 0.0, %v1003
        %v1005 = vpop.f32.mrf.mxu0
        %1006 = vmatprep.mubr.f32.mxu0 0.0
        %1007 = vmatmul.mubr.f32.gmra.mxu0 %v927
        %v1008 = vpop.f32.mrf.mxu0
        %v1009 = vadd.f32 0.0, %v1008
        %v1010 = vpop.f32.mrf.mxu0
        %1011 = vmatprep.mubr.f32.mxu0 0.0
        %1012 = vmatmul.mubr.f32.gmra.mxu0 %v930
        %v1013 = vpop.f32.mrf.mxu0
        %v1014 = vadd.f32 0.0, %v1013
        %v1015 = vpop.f32.mrf.mxu0
        %1016 = vdwg.mxu0
        %v1018 = vsel %vm919, %v825, 0
        %v1021 = vsel %vm919, %v826, 0
        %v1024 = vsel %vm919, %v827, 0
        %v1027 = vsel %vm919, %v828, 0
        %1029 = vmatprep.subr.mxu0 0.0
        %1030 = vmatpush1.msra.mxu0 0.0
        %1031 = vmatprep.subr.mxu0 0.0
        %1032 = vmatpush1.msra.mxu0 0.0
        %1033 = vmatprep.subr.mxu0 0.0
        %1034 = vmatpush1.msra.mxu0 0.0
        %1035 = vmatprep.subr.mxu0 0.0
        %1036 = vmatpush1.msra.mxu0 0.0
        %1037 = vmatprep.subr.mxu0 0.0
        %1038 = vmatpush1.msra.mxu0 0.0
        %1039 = vmatprep.subr.mxu0 0.0
        %1040 = vmatpush1.msra.mxu0 0.0
        %1041 = vmatprep.subr.mxu0 0.0
        %1042 = vmatpush1.msra.mxu0 0.0
        %1043 = vmatprep.subr.mxu0 0.0
        %1044 = vmatpush1.msra.mxu0 0.0
        %1045 = vmatprep.subr.mxu0 0.0
        %1046 = vmatpush1.msra.mxu0 0.0
        %1047 = vmatprep.subr.mxu0 0.0
        %1048 = vmatpush1.msra.mxu0 0.0
        %1049 = vmatprep.subr.mxu0 0.0
        %1050 = vmatpush1.msra.mxu0 0.0
        %1051 = vmatprep.subr.mxu0 0.0
        %1052 = vmatpush1.msra.mxu0 0.0
        %1053 = vmatprep.subr.mxu0 0.0
        %1054 = vmatpush1.msra.mxu0 %v824
        %1055 = vmatprep.subr.mxu0 0.0
        %1056 = vmatpush1.msra.mxu0 %v823
        %1057 = vmatprep.subr.mxu0 0.0
        %1058 = vmatpush1.msra.mxu0 %v822
        %1059 = vmatprep.subr.mxu0 0.0
        %1060 = vmatpush1.msra.mxu0 %v821
        %1061 = vmatprep.subr.mxu0 0.0
        %1062 = vmatpush2.msra.mxu0 0.0
        %1063 = vmatprep.subr.mxu0 0.0
        %1064 = vmatpush2.msra.mxu0 0.0
        %1065 = vmatprep.subr.mxu0 0.0
        %1066 = vmatpush2.msra.mxu0 0.0
        %1067 = vmatprep.subr.mxu0 0.0
        %1068 = vmatpush2.msra.mxu0 0.0
        %1069 = vmatprep.subr.mxu0 0.0
        %1070 = vmatpush2.msra.mxu0 0.0
        %1071 = vmatprep.subr.mxu0 0.0
        %1072 = vmatpush2.msra.mxu0 0.0
        %1073 = vmatprep.subr.mxu0 0.0
        %1074 = vmatpush2.msra.mxu0 0.0
        %1075 = vmatprep.subr.mxu0 0.0
        %1076 = vmatpush2.msra.mxu0 0.0
        %1077 = vmatprep.subr.mxu0 0.0
        %1078 = vmatpush2.msra.mxu0 0.0
        %1079 = vmatprep.subr.mxu0 0.0
        %1080 = vmatpush2.msra.mxu0 0.0
        %1081 = vmatprep.subr.mxu0 0.0
        %1082 = vmatpush2.msra.mxu0 0.0
        %1083 = vmatprep.subr.mxu0 0.0
        %1084 = vmatpush2.msra.mxu0 0.0
        %1085 = vmatprep.subr.mxu0 0.0
        %1086 = vmatpush2.msra.mxu0 0.0
        %1087 = vmatprep.subr.mxu0 0.0
        %1088 = vmatpush2.msra.mxu0 0.0
        %1089 = vmatprep.subr.mxu0 0.0
        %1090 = vmatpush2.msra.mxu0 0.0
        %1091 = vmatprep.subr.mxu0 0.0
        %1092 = vmatpush2.msra.mxu0 0.0
        %1093 = vmatprep.mubr.f32.mxu0 0.0
        %1094 = vmatmul.mubr.f32.gmra.mxu0 %v1018
        %v1095 = vpop.f32.mrf.mxu0
        %v1096 = vadd.f32 %v999, %v1095
        %v1097 = vpop.f32.mrf.mxu0
        %1098 = vmatprep.mubr.f32.mxu0 0.0
        %1099 = vmatmul.mubr.f32.gmra.mxu0 %v1021
        %v1100 = vpop.f32.mrf.mxu0
        %v1101 = vadd.f32 %v1004, %v1100
        %v1102 = vpop.f32.mrf.mxu0
        %1103 = vmatprep.mubr.f32.mxu0 0.0
        %1104 = vmatmul.mubr.f32.gmra.mxu0 %v1024
        %v1105 = vpop.f32.mrf.mxu0
        %v1106 = vadd.f32 %v1009, %v1105
        %v1107 = vpop.f32.mrf.mxu0
        %1108 = vmatprep.mubr.f32.mxu0 0.0
        %1109 = vmatmul.mubr.f32.gmra.mxu0 %v1027
        %v1110 = vpop.f32.mrf.mxu0
        %v1111 = vadd.f32 %v1014, %v1110
        %v1112 = vpop.f32.mrf.mxu0
        %1113 = vdwg.mxu0
        %v1114 = vld [vmem:[%s4] sm:$0xff]
        %v1115 = vld [vmem:[%s4 + $0x8] sm:$0xff]
        %v1116 = vld [vmem:[%s4 + $0x10] sm:$0xff]
        %v1117 = vld [vmem:[%s4 + $0x18] sm:$0xff]
        %1119 = vset.pattern.permute.xlu0 0
        %1120 = vperm.xlu0 %1119, %v1114
        %v1121 = vpop.permute.xlu0 %1120
        %1124 = vset.pattern.permute.xlu0 0
        %1125 = vperm.xlu0 %1124, %v1115
        %v1126 = vpop.permute.xlu0 %1125
        %1129 = vset.pattern.permute.xlu0 0
        %1130 = vperm.xlu0 %1129, %v1116
        %v1131 = vpop.permute.xlu0 %1130
        %1134 = vset.pattern.permute.xlu0 0
        %1135 = vperm.xlu0 %1134, %v1117
        %v1136 = vpop.permute.xlu0 %1135
        %v1138 = vadd.f32 %v1096, %v1121
        %v1139 = vadd.f32 %v1101, %v1126
        %v1140 = vadd.f32 %v1106, %v1131
        %v1141 = vadd.f32 %v1111, %v1136
        %v1142 = vmax.f32 %v1138, 0.0
        %v1143 = vmax.f32 %v1139, 0.0
        %v1144 = vmax.f32 %v1140, 0.0
        %v1145 = vmax.f32 %v1141, 0.0
        %v1146 = vld [vmem:[%s5] sm:$0xff]
        %v1147 = vld [vmem:[%s6] sm:$0xff]
        %1149 = vset.pattern.permute.xlu0 0
        %1150 = vperm.xlu0 %1149, %v1147
        %v1151 = vpop.permute.xlu0 %1150
        %v1154 = vsel %vm919, %v1146, 0
        %1156 = vmatprep.subr.mxu0 0.0
        %1157 = vmatpush1.msra.mxu0 0.0
        %1158 = vmatprep.subr.mxu0 0.0
        %1159 = vmatpush1.msra.mxu0 0.0
        %1160 = vmatprep.subr.mxu0 0.0
        %1161 = vmatpush1.msra.mxu0 0.0
        %1162 = vmatprep.subr.mxu0 0.0
        %1163 = vmatpush1.msra.mxu0 0.0
        %1164 = vmatprep.subr.mxu0 0.0
        %1165 = vmatpush1.msra.mxu0 0.0
        %1166 = vmatprep.subr.mxu0 0.0
        %1167 = vmatpush1.msra.mxu0 0.0
        %1168 = vmatprep.subr.mxu0 0.0
        %1169 = vmatpush1.msra.mxu0 0.0
        %1170 = vmatprep.subr.mxu0 0.0
        %1171 = vmatpush1.msra.mxu0 0.0
        %1172 = vmatprep.subr.mxu0 0.0
        %1173 = vmatpush1.msra.mxu0 0.0
        %1174 = vmatprep.subr.mxu0 0.0
        %1175 = vmatpush1.msra.mxu0 0.0
        %1176 = vmatprep.subr.mxu0 0.0
        %1177 = vmatpush1.msra.mxu0 0.0
        %1178 = vmatprep.subr.mxu0 0.0
        %1179 = vmatpush1.msra.mxu0 0.0
        %1180 = vmatprep.subr.mxu0 0.0
        %1181 = vmatpush1.msra.mxu0 %v1145
        %1182 = vmatprep.subr.mxu0 0.0
        %1183 = vmatpush1.msra.mxu0 %v1144
        %1184 = vmatprep.subr.mxu0 0.0
        %1185 = vmatpush1.msra.mxu0 %v1143
        %1186 = vmatprep.subr.mxu0 0.0
        %1187 = vmatpush1.msra.mxu0 %v1142
        %1188 = vmatprep.subr.mxu0 0.0
        %1189 = vmatpush2.msra.mxu0 0.0
        %1190 = vmatprep.subr.mxu0 0.0
        %1191 = vmatpush2.msra.mxu0 0.0
        %1192 = vmatprep.subr.mxu0 0.0
        %1193 = vmatpush2.msra.mxu0 0.0
        %1194 = vmatprep.subr.mxu0 0.0
        %1195 = vmatpush2.msra.mxu0 0.0
        %1196 = vmatprep.subr.mxu0 0.0
        %1197 = vmatpush2.msra.mxu0 0.0
        %1198 = vmatprep.subr.mxu0 0.0
        %1199 = vmatpush2.msra.mxu0 0.0
        %1200 = vmatprep.subr.mxu0 0.0
        %1201 = vmatpush2.msra.mxu0 0.0
        %1202 = vmatprep.subr.mxu0 0.0
        %1203 = vmatpush2.msra.mxu0 0.0
        %1204 = vmatprep.subr.mxu0 0.0
        %1205 = vmatpush2.msra.mxu0 0.0
        %1206 = vmatprep.subr.mxu0 0.0
        %1207 = vmatpush2.msra.mxu0 0.0
        %1208 = vmatprep.subr.mxu0 0.0
        %1209 = vmatpush2.msra.mxu0 0.0
        %1210 = vmatprep.subr.mxu0 0.0
        %1211 = vmatpush2.msra.mxu0 0.0
        %1212 = vmatprep.subr.mxu0 0.0
        %1213 = vmatpush2.msra.mxu0 0.0
        %1214 = vmatprep.subr.mxu0 0.0
        %1215 = vmatpush2.msra.mxu0 0.0
        %1216 = vmatprep.subr.mxu0 0.0
        %1217 = vmatpush2.msra.mxu0 0.0
        %1218 = vmatprep.subr.mxu0 0.0
        %1219 = vmatpush2.msra.mxu0 0.0
        %1220 = vmatprep.mubr.f32.mxu0 0.0
        %1221 = vmatmul.mubr.f32.gmra.mxu0 %v1154
        %v1222 = vpop.f32.mrf.mxu0
        %v1223 = vadd.f32 %v1151, %v1222
        %v1224 = vpop.f32.mrf.mxu0
        %1225 = vdwg.mxu0
        %1226 = vst [vmem:[%s311] sm:$0xff] %v1223
        %s1227 = sand.u32 %s204, 1
        %s1228 = scalar_lea.sflag [#allocation4], %s1227
        %s1229 = sand.u32 %s204, 1
        %s1230 = smul.addr %s1229, 8
        %s1231 = scalar_lea.vmem [#allocation5], %s1230
        // Predicated region
        $region57: #{tpu_custom_call.1} parent=51 // pred_check
          %p1232 = pneg %p214
        $region58: #{tpu_custom_call.1} parent=51 // pred_check_branch
          %1234 = sbr.rel (%p1232) target = $region60
        $region59: #{tpu_custom_call.1} parent=51 // pred_region
          %s1236 = ssub.s32 128, 128
          %1237 = vsyncadd %s1228, %s1236
          %s1238 = smul.addr %s23, 128
          %s1239 = scalar_lea.hbm %s8, %s1238
          %s1241 = sshll.u32 %s1231, 4
          %s1242 = int_to_ptr.vmem [resolvable:$true] %s1241
          %1244 = dma.vmem_to_hbm [thread:$0]  %s1242, 128, %s1239, %s1228
        $region60: #{tpu_custom_call.1} parent=51 // pred_fallthru
          _
      $region52: #{tpu_custom_call.1} parent=5 // pred_fallthru
        _
      %p1245 = scmp.le.s32.totalorder 2, %s18
      // Predicated region
      $region61: #{tpu_custom_call.1} parent=5 // pred_check
        %p1246 = pneg %p1245
      $region62: #{tpu_custom_call.1} parent=5 // pred_check_branch
        %1248 = sbr.rel (%p1246) target = $region64
      $region63: #{tpu_custom_call.1} parent=5 // pred_region
        %s1249 = ssub.s32 %s18, 2
        // Predicated region
        $region65: #{tpu_custom_call.1} parent=63 // pred_check
          %p1250 = pneg %p220
        $region66: #{tpu_custom_call.1} parent=63 // pred_check_branch
          %1252 = sbr.rel (%p1250) target = $region68
        $region67: #{tpu_custom_call.1} parent=63 // pred_region
          %s1253 = sand.u32 %s205, 1
          %s1254 = scalar_lea.sflag [#allocation4], %s1253
          %s1255 = sand.u32 %s205, 1
          %s1256 = smul.addr %s1255, 8
          %s1257 = scalar_lea.vmem [#allocation5], %s1256
          %1258 = dma.done %s1254, 128
        $region68: #{tpu_custom_call.1} parent=63 // pred_fallthru
          _
      $region64: #{tpu_custom_call.1} parent=5 // pred_fallthru
        _
    $region6: #{tpu_custom_call.1} parent=1 // loop_footer
      %s22 = sadd.s32 1, %s18
    $region7: #{tpu_custom_call.1} parent=1 // loop_footer_branch
      %17 = sbr.rel target = $region3
    $region8: #{tpu_custom_call.1} parent=1 // loop_exit
      _
    %1259 = vsyncpa [#allocation3], 1
    %s1260 = scalar_lea.sflag [#allocation3], 1
    %1261 = vsyncpa %s1260, 1
    %1262 = vsyncpa [#allocation4], 1
    %s1263 = scalar_lea.sflag [#allocation4], 1
    %1264 = vsyncpa %s1263, 1

</llo_original>
